<compile_context>
chip_gen: v5e
topology: v5e:2x2
jax: 0.10.0
libtpu: 0.0.40
codegen_flags: <defaults>
</compile_context>

<pallas_src>
import functools

import jax
import jax.numpy as jnp
from jax.experimental import pallas as pl
from jax.experimental.pallas import tpu as pltpu

_LANES = 1024       # lane width: multiple of 128 -> unmasked full-width stores
_TILE_ROWS = 256    # 256 * 1024 * 4 B = 1 MiB per f32 tile; 2x(in+out) bufs = 4 MiB


def _copy_kernel(x_ref, o_ref):
    # Pure pass-through: copy the whole VMEM tile to the output tile.
    o_ref[...] = x_ref[...]


@functools.partial(jax.jit, static_argnames=("detach",))
def pallas_pass(x, detach: bool = False):
    """Identity forward of `Pass`. If detach, stop gradients (torch .detach())."""
    if detach:
        x = jax.lax.stop_gradient(x)

    orig_shape = x.shape

    # Flatten to 1D, then reshape to a lane-dense (rows, 1024) slab, padding
    # the tail if the element count is not a multiple of 1024.
    flat = x.reshape(-1)
    n = flat.shape[0]
    rows = pl.cdiv(n, _LANES)
    padded = rows * _LANES
    if padded != n:
        flat = jnp.pad(flat, (0, padded - n))
    x2 = flat.reshape(rows, _LANES)

    # Tile rows: multiple of 8 when tiling, or the full row extent when small
    # (block dim equal to the full array dim satisfies the (8, 128) rule).
    tr = _TILE_ROWS if rows > _TILE_ROWS else rows
    grid = (pl.cdiv(rows, tr),)

    out2 = pl.pallas_call(
        _copy_kernel,
        out_shape=jax.ShapeDtypeStruct(x2.shape, x2.dtype),
        grid=grid,
        in_specs=[pl.BlockSpec((tr, _LANES), lambda i: (i, 0))],
        out_specs=pl.BlockSpec((tr, _LANES), lambda i: (i, 0)),
        # Identity copy: let the output share the input buffer when possible.
        input_output_aliases={0: 0},
        compiler_params=pltpu.CompilerParams(
            dimension_semantics=("parallel",),
        ),
    )(x2)

    out_flat = out2.reshape(-1)
    if padded != n:
        out_flat = out_flat[:n]
    return out_flat.reshape(orig_shape)


if __name__ == "__main__":
    key = jax.random.PRNGKey(0)
    # Small NCHW-style input consistent with typical conv feature maps.
    x = jax.random.normal(key, (2, 4, 16, 16), dtype=jnp.float32)

    y = jax.block_until_ready(pallas_pass(x, detach=False))
    y_detached = jax.block_until_ready(pallas_pass(x, detach=True))

    assert y.shape == x.shape and y.dtype == x.dtype
    assert jnp.array_equal(y, x)
    assert y_detached.shape == x.shape and y_detached.dtype == x.dtype
    assert jnp.array_equal(y_detached, x)

    print("KERNEL_OK")
</pallas_src>

<mosaic_0001>
module attributes {stable_mosaic.version = 11 : i64} {
  func.func @_copy_kernel(%arg0: i32, %arg1: memref<2x1024xf32, #tpu.memory_space<vmem>>, %arg2: memref<2x1024xf32, #tpu.memory_space<vmem>>) attributes {dimension_semantics = [#tpu.dimension_semantics<parallel>], iteration_bounds = array<i64: 1>, scalar_prefetch = 0 : i64, scratch_operands = 0 : i64, tpu.core_type = #tpu.core_type<tc>, window_params = [{transform_indices = @transform_0, window_bounds = array<i64: 2, 1024>}, {transform_indices = @transform_1, window_bounds = array<i64: 2, 1024>}]} {
    %c0 = arith.constant 0 : index
    %c0_0 = arith.constant 0 : index
    %0 = vector.load %arg1[%c0, %c0_0] : memref<2x1024xf32, #tpu.memory_space<vmem>>, vector<2x1024xf32>
    %c0_1 = arith.constant 0 : index
    %c0_2 = arith.constant 0 : index
    %1 = vector.load %arg2[%c0_1, %c0_2] : memref<2x1024xf32, #tpu.memory_space<vmem>>, vector<2x1024xf32>
    tpu.vector_store %arg2[%c0_1, %c0_2], %0 {strides = array<i32>} : memref<2x1024xf32, #tpu.memory_space<vmem>>, vector<2x1024xf32>,
    return
  }
  func.func @transform_0(%arg0: i32) -> (i32, i32) {
    %c0_i32 = arith.constant 0 : i32
    %c0_i32_0 = arith.constant 0 : i32
    return %arg0, %c0_i32 : i32, i32
  }
  func.func @transform_1(%arg0: i32) -> (i32, i32) {
    %c0_i32 = arith.constant 0 : i32
    %c0_i32_0 = arith.constant 0 : i32
    return %arg0, %c0_i32 : i32, i32
  }
}

</mosaic_0001>

<llo_original>
// kernel: pallas_pass.1
$region0: #{pallas_pass.1}
  #allocation0 [shape = 'u32[]', space=smem, size = 0x4, offset = 0x4, fixed_abs, tag = 'smem constant byte address 0x4 - core index']
  #allocation1 [shape = 'u32[72,128]{1,0:T(1,128)}', space=vmem, size = 0x9000, scoped, tag = 'internal scratch']
  %s0 = inlined_call_operand.vmem [shape: f32[2,1024], index: 0, kind: input, shape index: {}, may-alias: {0,1}]
  %s1 = inlined_call_operand.vmem [shape: f32[2,1024], index: 1, kind: output, shape index: {}, may-alias: {0,1}]
  %s2 = sld [smem:[#allocation0]]
  $region14: #{pallas_pass.1} parent=0
    _
  %s4 = ssub.s32 1, %s2
  %s5 = scalar_select 0, %s4, %s2
  // Predicated region
  $region2: #{pallas_pass.1} parent=0 // pred_check
    _
  $region3: #{pallas_pass.1} parent=0 // pred_check_branch
    %7 = sbr.rel (0) target = $region5
  $region4: #{pallas_pass.1} parent=0 // pred_region
    _
  $region5: #{pallas_pass.1} parent=0 // pred_fallthru
    _
  %v8 = vld [vmem:[%s0] sm:$0xff]
  %v9 = vld [vmem:[%s0 + $0x8] sm:$0xff]
  %10 = vst [vmem:[%s1] sm:$0xff] %v8
  %11 = vst [vmem:[%s1 + $0x8] sm:$0xff] %v9
  // Predicated region
  $region6: #{pallas_pass.1} parent=0 // pred_check
    _
  $region7: #{pallas_pass.1} parent=0 // pred_check_branch
    %13 = sbr.rel (0) target = $region9
  $region8: #{pallas_pass.1} parent=0 // pred_region
    _
  $region9: #{pallas_pass.1} parent=0 // pred_fallthru
    _
  // Predicated region
  $region10: #{pallas_pass.1} parent=0 // pred_check
    _
  $region11: #{pallas_pass.1} parent=0 // pred_check_branch
    %15 = sbr.rel (0) target = $region13
  $region12: #{pallas_pass.1} parent=0 // pred_region
    _
  $region13: #{pallas_pass.1} parent=0 // pred_fallthru
    _

</llo_original>
